<compile_context>
chip_gen: v5e
topology: v5e:2x2
jax: 0.10.0
libtpu: 0.0.40
codegen_flags: <defaults>
</compile_context>

<pallas_src>
import jax
import jax.numpy as jnp
from jax.experimental import pallas as pl
from jax.experimental.pallas import tpu as pltpu


def _time_aware_reward_kernel(state_ref, action_ref, next_state_ref, w_ref, out_ref):
    # Load the current batch tile and compute in f32 regardless of input dtype.
    s = state_ref[...].astype(jnp.float32)        # (TB, D1)
    ns = next_state_ref[...].astype(jnp.float32)  # (TB, D1)
    a = action_ref[...].astype(jnp.float32)       # (TB, A)
    w = w_ref[...]                                # (1, D1) f32, w[:, -1] == 0

    # Linear goal term on the time-stripped next_state: the wrapper guarantees
    # the time-slot weight is zero, so no explicit mask is needed here.
    lin = jnp.sum(ns * w, axis=-1, keepdims=True)                     # (TB, 1)

    # Action cost.
    act_cost = 0.1 * jnp.sum(a * a, axis=-1, keepdims=True)           # (TB, 1)

    # Smoothness cost on time-stripped features: mask the diff once.
    d1 = s.shape[-1]
    col = jax.lax.broadcasted_iota(jnp.int32, s.shape, dimension=1)
    keep = (col < (d1 - 1)).astype(jnp.float32)   # static -> compile-time const
    diff = (ns - s) * keep
    smooth_cost = 0.05 * jnp.sum(diff * diff, axis=-1, keepdims=True)  # (TB, 1)

    out_ref[...] = (lin - act_cost - smooth_cost).astype(out_ref.dtype)


def time_aware_reward(state, action, next_state, weights, *, tile_b=1024):
    """state/next_state: (B, D+1); action: (B, A); weights: (D+1,) -> reward (B,)."""
    B, D1 = state.shape
    A = action.shape[-1]

    # Zero the time-slot weight: this IS the `state[..., :-1]` semantics for the
    # linear term, and makes dropping the in-kernel mask exact.
    w2d = weights.astype(jnp.float32).reshape(1, D1)
    w2d = w2d.at[0, D1 - 1].set(0.0)

    # Batch tile: multiple of 8 sublanes, capped at tile_b (512-4096 sweet spot).
    tb = min(tile_b, pl.cdiv(B, 8) * 8)
    b_pad = pl.cdiv(B, tb) * tb
    if b_pad != B:
        pad = b_pad - B
        state = jnp.pad(state, ((0, pad), (0, 0)))
        next_state = jnp.pad(next_state, ((0, pad), (0, 0)))
        action = jnp.pad(action, ((0, pad), (0, 0)))

    out = pl.pallas_call(
        _time_aware_reward_kernel,
        out_shape=jax.ShapeDtypeStruct((b_pad, 1), jnp.float32),
        grid=(b_pad // tb,),
        in_specs=[
            pl.BlockSpec((tb, D1), lambda i: (i, 0)),
            pl.BlockSpec((tb, A), lambda i: (i, 0)),
            pl.BlockSpec((tb, D1), lambda i: (i, 0)),
            pl.BlockSpec((1, D1), lambda i: (0, 0)),
        ],
        out_specs=pl.BlockSpec((tb, 1), lambda i: (i, 0)),
        compiler_params=pltpu.CompilerParams(
            dimension_semantics=("parallel",),
        ),
    )(state, action, next_state, w2d)
    return out[:B, 0]


def _reference(state, action, next_state, weights):
    s = state[..., :-1]
    ns = next_state[..., :-1]
    w = weights[:-1]
    lin = jnp.sum(ns * w, axis=-1)
    act_cost = 0.1 * jnp.sum(action * action, axis=-1)
    smooth = 0.05 * jnp.sum((ns - s) ** 2, axis=-1)
    return lin - act_cost - smooth


if __name__ == "__main__":
    B, D, A = 8, 16, 6          # obs_dim (without time) = 16 -> state has 17 features
    D1 = D + 1

    key = jax.random.PRNGKey(0)
    k1, k2, k3 = jax.random.split(key, 3)
    state = jax.random.normal(k1, (B, D1), dtype=jnp.float32)
    action = jax.random.normal(k2, (B, A), dtype=jnp.float32)
    next_state = jax.random.normal(k3, (B, D1), dtype=jnp.float32)

    # Deterministic "parameters" of the synthetic reward_fn (time slot weight
    # is zeroed inside the wrapper regardless of what is passed here).
    weights = jnp.concatenate(
        [jnp.linspace(-1.0, 1.0, D, dtype=jnp.float32), jnp.zeros((1,), jnp.float32)]
    )

    reward = time_aware_reward(state, action, next_state, weights)
    jax.block_until_ready(reward)

    ref = _reference(state, action, next_state, weights)
    assert reward.shape == (B,)
    assert jnp.allclose(reward, ref, atol=1e-5, rtol=1e-5)

    print("KERNEL_OK")
</pallas_src>

<mosaic_0001>
module attributes {stable_mosaic.version = 11 : i64} {
  func.func @_time_aware_reward_kernel(%arg0: i32, %arg1: memref<8x17xf32, #tpu.memory_space<vmem>>, %arg2: memref<8x6xf32, #tpu.memory_space<vmem>>, %arg3: memref<8x17xf32, #tpu.memory_space<vmem>>, %arg4: memref<1x17xf32, #tpu.memory_space<vmem>>, %arg5: memref<8x1xf32, #tpu.memory_space<vmem>>) attributes {dimension_semantics = [#tpu.dimension_semantics<parallel>], iteration_bounds = array<i64: 1>, scalar_prefetch = 0 : i64, scratch_operands = 0 : i64, tpu.core_type = #tpu.core_type<tc>, window_params = [{transform_indices = @transform_0, window_bounds = array<i64: 8, 17>}, {transform_indices = @transform_1, window_bounds = array<i64: 8, 6>}, {transform_indices = @transform_2, window_bounds = array<i64: 8, 17>}, {pipeline_mode = #tpu.pipeline_mode<synchronous>, transform_indices = @transform_3, window_bounds = array<i64: 1, 17>}, {transform_indices = @transform_4, window_bounds = array<i64: 8, 1>}]} {
    %c0 = arith.constant 0 : index
    %c0_0 = arith.constant 0 : index
    %0 = vector.load %arg1[%c0, %c0_0] : memref<8x17xf32, #tpu.memory_space<vmem>>, vector<8x17xf32>
    %c0_1 = arith.constant 0 : index
    %c0_2 = arith.constant 0 : index
    %1 = vector.load %arg3[%c0_1, %c0_2] : memref<8x17xf32, #tpu.memory_space<vmem>>, vector<8x17xf32>
    %c0_3 = arith.constant 0 : index
    %c0_4 = arith.constant 0 : index
    %2 = vector.load %arg2[%c0_3, %c0_4] : memref<8x6xf32, #tpu.memory_space<vmem>>, vector<8x6xf32>
    %c0_5 = arith.constant 0 : index
    %c0_6 = arith.constant 0 : index
    %3 = vector.load %arg4[%c0_5, %c0_6] : memref<1x17xf32, #tpu.memory_space<vmem>>, vector<1x17xf32>
    %4 = vector.broadcast %3 : vector<1x17xf32> to vector<8x17xf32>
    %5 = arith.mulf %1, %4 : vector<8x17xf32>
    %cst = arith.constant dense<0.000000e+00> : vector<8xf32>
    %6 = vector.multi_reduction <add>, %5, %cst [1] : vector<8x17xf32> to vector<8xf32>
    %7 = vector.shape_cast %6 : vector<8xf32> to vector<8x1xf32>
    %8 = arith.mulf %2, %2 : vector<8x6xf32>
    %cst_7 = arith.constant dense<0.000000e+00> : vector<8xf32>
    %9 = vector.multi_reduction <add>, %8, %cst_7 [1] : vector<8x6xf32> to vector<8xf32>
    %10 = vector.shape_cast %9 : vector<8xf32> to vector<8x1xf32>
    %cst_8 = arith.constant 1.000000e-01 : f32
    %11 = vector.broadcast %cst_8 : f32 to vector<8x1xf32>
    %12 = arith.mulf %11, %10 : vector<8x1xf32>
    %13 = tpu.iota {dimensions = array<i32: 1>} : vector<8x17xi32>
    %c16_i32 = arith.constant 16 : i32
    %14 = vector.broadcast %c16_i32 : i32 to vector<8x17xi32>
    %15 = arith.cmpi slt, %13, %14 : vector<8x17xi32>
    %16 = arith.extui %15 : vector<8x17xi1> to vector<8x17xi32>
    %17 = arith.sitofp %16 : vector<8x17xi32> to vector<8x17xf32>
    %18 = arith.subf %1, %0 : vector<8x17xf32>
    %19 = arith.mulf %18, %17 : vector<8x17xf32>
    %20 = arith.mulf %19, %19 : vector<8x17xf32>
    %cst_9 = arith.constant dense<0.000000e+00> : vector<8xf32>
    %21 = vector.multi_reduction <add>, %20, %cst_9 [1] : vector<8x17xf32> to vector<8xf32>
    %22 = vector.shape_cast %21 : vector<8xf32> to vector<8x1xf32>
    %cst_10 = arith.constant 5.000000e-02 : f32
    %23 = vector.broadcast %cst_10 : f32 to vector<8x1xf32>
    %24 = arith.mulf %23, %22 : vector<8x1xf32>
    %25 = arith.subf %7, %12 : vector<8x1xf32>
    %26 = arith.subf %25, %24 : vector<8x1xf32>
    %c0_11 = arith.constant 0 : index
    %c0_12 = arith.constant 0 : index
    %27 = vector.load %arg5[%c0_11, %c0_12] : memref<8x1xf32, #tpu.memory_space<vmem>>, vector<8x1xf32>
    tpu.vector_store %arg5[%c0_11, %c0_12], %26 {strides = array<i32>} : memref<8x1xf32, #tpu.memory_space<vmem>>, vector<8x1xf32>,
    return
  }
  func.func @transform_0(%arg0: i32) -> (i32, i32) {
    %c0_i32 = arith.constant 0 : i32
    %c0_i32_0 = arith.constant 0 : i32
    return %arg0, %c0_i32 : i32, i32
  }
  func.func @transform_1(%arg0: i32) -> (i32, i32) {
    %c0_i32 = arith.constant 0 : i32
    %c0_i32_0 = arith.constant 0 : i32
    return %arg0, %c0_i32 : i32, i32
  }
  func.func @transform_2(%arg0: i32) -> (i32, i32) {
    %c0_i32 = arith.constant 0 : i32
    %c0_i32_0 = arith.constant 0 : i32
    return %arg0, %c0_i32 : i32, i32
  }
  func.func @transform_3(%arg0: i32) -> (i32, i32) {
    %c0_i32 = arith.constant 0 : i32
    %c0_i32_0 = arith.constant 0 : i32
    %c0_i32_1 = arith.constant 0 : i32
    return %c0_i32, %c0_i32_0 : i32, i32
  }
  func.func @transform_4(%arg0: i32) -> (i32, i32) {
    %c0_i32 = arith.constant 0 : i32
    %c0_i32_0 = arith.constant 0 : i32
    return %arg0, %c0_i32 : i32, i32
  }
}

</mosaic_0001>

<llo_original>
// kernel: tpu_custom_call.1
$region0: #{tpu_custom_call.1}
  #allocation0 [shape = 'u32[]', space=smem, size = 0x4, offset = 0x4, fixed_abs, tag = 'smem constant byte address 0x4 - core index']
  #allocation1 [shape = 'u32[72,128]{1,0:T(1,128)}', space=vmem, size = 0x9000, scoped, tag = 'internal scratch']
  %s0 = inlined_call_operand.hbm [shape: f32[8,17], index: 0, kind: input, shape index: {}]
  %s1 = inlined_call_operand.hbm [shape: f32[8,6], index: 1, kind: input, shape index: {}]
  %s2 = inlined_call_operand.hbm [shape: f32[8,17], index: 2, kind: input, shape index: {}]
  %s3 = inlined_call_operand.vmem [shape: f32[1,17], index: 3, kind: input, shape index: {}]
  %s4 = inlined_call_operand.vmem [shape: f32[8,1], index: 4, kind: output, shape index: {}]
  %s5 = sld [smem:[#allocation0]]
  $region38: #{tpu_custom_call.1} parent=0
    _
  %s7 = ssub.s32 1, %s5
  %s8 = scalar_select 0, %s7, %s5
  $region1: #{tpu_custom_call.1} parent=0
    #allocation2 [shape = 'u8[4096]{0}', space=vmem, size = 0x1000, scoped, tag = 'input window, operand 0, single buffered']
    #allocation3 [shape = 's32[1]{0}', space=sflag, size = 0x4, scoped, tag = 'scoped memory for tpu_custom_call.1']
    #allocation4 [shape = 'u8[4096]{0}', space=vmem, size = 0x1000, scoped, tag = 'input window, operand 1, single buffered']
    #allocation5 [shape = 's32[1]{0}', space=sflag, size = 0x4, scoped, tag = 'scoped memory for tpu_custom_call.1']
    #allocation6 [shape = 'u8[4096]{0}', space=vmem, size = 0x1000, scoped, tag = 'input window, operand 2, single buffered']
    %9 = vsyncpa [#allocation3], 0
    %10 = vsyncpa [#allocation5], 0
    // Predicated region
    $region2: #{tpu_custom_call.1} parent=1 // pred_check
      _
    $region3: #{tpu_custom_call.1} parent=1 // pred_check_branch
      %12 = sbr.rel (0) target = $region5
    $region4: #{tpu_custom_call.1} parent=1 // pred_region
      %14 = vsyncadd [#allocation3], 0
      %s16 = sshll.u32 %s0, 4
      %s17 = int_to_ptr.hbm [resolvable:$true] %s16
      %s18 = sshll.u32 [#allocation2], 4
      %s19 = int_to_ptr.vmem [resolvable:$true] %s18
      %21 = dma.hbm_to_vmem [thread:$0]  %s17, 128, %s19, [#allocation3]
    $region5: #{tpu_custom_call.1} parent=1 // pred_fallthru
      _
    // Predicated region
    $region6: #{tpu_custom_call.1} parent=1 // pred_check
      _
    $region7: #{tpu_custom_call.1} parent=1 // pred_check_branch
      %23 = sbr.rel (0) target = $region9
    $region8: #{tpu_custom_call.1} parent=1 // pred_region
      %25 = vsyncadd [#allocation5], 0
      %s27 = sshll.u32 %s1, 4
      %s28 = int_to_ptr.hbm [resolvable:$true] %s27
      %s29 = sshll.u32 [#allocation4], 4
      %s30 = int_to_ptr.vmem [resolvable:$true] %s29
      %32 = dma.hbm_to_vmem [thread:$0]  %s28, 128, %s30, [#allocation5]
    $region9: #{tpu_custom_call.1} parent=1 // pred_fallthru
      _
    // Predicated region
    $region10: #{tpu_custom_call.1} parent=1 // pred_check
      _
    $region11: #{tpu_custom_call.1} parent=1 // pred_check_branch
      %34 = sbr.rel (0) target = $region13
    $region12: #{tpu_custom_call.1} parent=1 // pred_region
      %36 = vsyncadd [#allocation5], 0
      %s38 = sshll.u32 %s2, 4
      %s39 = int_to_ptr.hbm [resolvable:$true] %s38
      %s40 = sshll.u32 [#allocation6], 4
      %s41 = int_to_ptr.vmem [resolvable:$true] %s40
      %43 = dma.hbm_to_vmem [thread:$0]  %s39, 128, %s41, [#allocation5]
    $region13: #{tpu_custom_call.1} parent=1 // pred_fallthru
      _
    // Predicated region
    $region14: #{tpu_custom_call.1} parent=1 // pred_check
      _
    $region15: #{tpu_custom_call.1} parent=1 // pred_check_branch
      %45 = sbr.rel (0) target = $region17
    $region16: #{tpu_custom_call.1} parent=1 // pred_region
      _
    $region17: #{tpu_custom_call.1} parent=1 // pred_fallthru
      _
    // Predicated region
    $region18: #{tpu_custom_call.1} parent=1 // pred_check
      _
    $region19: #{tpu_custom_call.1} parent=1 // pred_check_branch
      %47 = sbr.rel (0) target = $region21
    $region20: #{tpu_custom_call.1} parent=1 // pred_region
      %49 = dma.done [#allocation3], 128
    $region21: #{tpu_custom_call.1} parent=1 // pred_fallthru
      _
    // Predicated region
    $region22: #{tpu_custom_call.1} parent=1 // pred_check
      _
    $region23: #{tpu_custom_call.1} parent=1 // pred_check_branch
      %51 = sbr.rel (0) target = $region25
    $region24: #{tpu_custom_call.1} parent=1 // pred_region
      %53 = dma.done [#allocation5], 128
    $region25: #{tpu_custom_call.1} parent=1 // pred_fallthru
      _
    // Predicated region
    $region26: #{tpu_custom_call.1} parent=1 // pred_check
      _
    $region27: #{tpu_custom_call.1} parent=1 // pred_check_branch
      %55 = sbr.rel (0) target = $region29
    $region28: #{tpu_custom_call.1} parent=1 // pred_region
      %57 = dma.done [#allocation5], 128
    $region29: #{tpu_custom_call.1} parent=1 // pred_fallthru
      _
    %v58 = vld [vmem:[#allocation2] sm:$0xff]
    %v59 = vld [vmem:[#allocation6] sm:$0xff]
    %v60 = vld [vmem:[#allocation4] sm:$0xff]
    %v61 = vld [vmem:[%s3] sm:$0x1]
    %v63 = vperm.slane %v61, 0
    %v65 = vmul.f32 %v59, %v63
    %vm66 = vcmask 138240
    %v67 = vsel %vm66, %v65, 0.0
    %68 = vadd.xlane.f32.xlu0 %v67
    %v69 = vpop.xlane.xlu0 %68
    %v70 = vmul.f32 %v60, %v60
    %vm71 = vcmask 48128
    %v72 = vsel %vm71, %v70, 0.0
    %73 = vadd.xlane.f32.xlu0 %v72
    %v74 = vpop.xlane.xlu0 %73
    %v75 = vmul.f32 %v74, 0.1
    %v76 = vlaneseq
    %v77 = vand.u32 %v76, 127
    %vm78 = vcmp.lt.s32.totalorder %v77, 16
    %v79 = vsel %vm78, 1, 0
    %v80 = vcvt.s32.f32 %v79
    %v81 = vsub.f32 %v59, %v58
    %v82 = vmul.f32 %v81, %v80
    %v83 = vmul.f32 %v82, %v82
    %v84 = vsel %vm66, %v83, 0.0
    %85 = vadd.xlane.f32.xlu0 %v84
    %v86 = vpop.xlane.xlu0 %85
    %v87 = vmul.f32 %v86, 0.05
    %v88 = vsub.f32 %v69, %v75
    %v89 = vsub.f32 %v88, %v87
    %vm90 = vcmask 7168
    %91 = vst.msk [vmem:[%s4] sm:$0xff] %vm90, %v89
    // Predicated region
    $region30: #{tpu_custom_call.1} parent=1 // pred_check
      _
    $region31: #{tpu_custom_call.1} parent=1 // pred_check_branch
      %93 = sbr.rel (0) target = $region33
    $region32: #{tpu_custom_call.1} parent=1 // pred_region
      _
    $region33: #{tpu_custom_call.1} parent=1 // pred_fallthru
      _
    // Predicated region
    $region34: #{tpu_custom_call.1} parent=1 // pred_check
      _
    $region35: #{tpu_custom_call.1} parent=1 // pred_check_branch
      %95 = sbr.rel (0) target = $region37
    $region36: #{tpu_custom_call.1} parent=1 // pred_region
      _
    $region37: #{tpu_custom_call.1} parent=1 // pred_fallthru
      _
    %96 = vsyncpa [#allocation3], 1
    %97 = vsyncpa [#allocation5], 1

</llo_original>
